<compile_context>
chip_gen: v7x
topology: tpu7x:2x2x1
jax: 0.10.0
libtpu: 0.0.40
codegen_flags: <defaults>
</compile_context>

<pallas_src>
import jax
import jax.numpy as jnp
from jax.experimental import pallas as pl
from jax.experimental.pallas import tpu as pltpu


# ----------------------------- fused Pallas kernel ---------------------------

def _make_fused_kernel(TB, H, W, Cout):
    WCout = W * Cout
    inv_hw = 1.0 / float(H * W)

    def kernel(x_ref, w_ref, cb_ref, m2_ref, fcb_ref, o_ref):
        # x_ref  : (TB, Hp, Wp*Cin)     f32   padded activation planes (TB batches)
        # w_ref  : (3, Wp*Cin, W*Cout)  bf16  banded conv weights (one per dh tap)
        # cb_ref : (1, W*Cout)          f32   conv bias tiled over w
        # m2_ref : (W*Cout, Nout)       f32   GAP(sum over w) folded into fc_w
        # fcb_ref: (1, Nout)            f32   fc bias
        # o_ref  : (TB, Nout)           f32   this tile's output block
        WpC = x_ref.shape[-1]

        # Conv + bias: accumulator initialised with the broadcast conv bias;
        # 3 banded taps, each ONE (TB*H, WpC) x (WpC, WCout) matmul for the
        # whole batch tile, bf16 operands (cast at the dot) / f32 accumulation.
        # TODO(synk): on v5e/v6e, K-fuse the 3 taps into one
        # (TB*H, 3*WpC) x (3*WpC, WCout) matmul if a bundle dump shows the
        # per-tap MRF drain; on v7x the MRB accumulates in place so 3 taps are
        # already cheap.
        acc = jnp.broadcast_to(cb_ref[...], (TB * H, WCout))
        for dh in range(3):                                   # static unroll
            lhs = x_ref[:, pl.ds(dh, H), :].reshape(TB * H, WpC)
            acc = acc + jnp.dot(lhs.astype(jnp.bfloat16), w_ref[dh],
                                preferred_element_type=jnp.float32)

        feat = jnp.maximum(acc, 0.0)                          # ReLU, f32, (TB*H, WCout)

        # GAP + Linear for the whole tile: per-batch sublane reduce over h (the
        # sum over w is folded into m2), then a single (TB, WCout) x (WCout, Nout)
        # matmul; divide by H*W last.
        # TODO(synk): run the ReLU / reduce in bf16 on v6e/v7x once TB*H grows
        # (v5e has no bf16 VPU, keep f32 there).
        colsum = jnp.sum(feat.reshape(TB, H, WCout), axis=1)  # (TB, WCout) f32
        out = (jnp.dot(colsum, m2_ref[...],
                       preferred_element_type=jnp.float32) * inv_hw
               + fcb_ref[...])                                # (TB, Nout) f32

        o_ref[...] = out

    return kernel


def fused_forward(x2, wmat, cbias, m2, fcb, *, H, W, Cout, TB):
    Bp, Hp, WpC = x2.shape
    WCout = W * Cout
    Nout = m2.shape[-1]
    n_tiles = Bp // TB
    kernel = _make_fused_kernel(TB, H, W, Cout)

    flops = Bp * (3 * 2 * H * WpC * WCout          # conv tap matmuls
                  + 4 * H * WCout                  # bias add + ReLU + reduce
                  + 2 * WCout * Nout)              # GAP-folded FC
    bytes_accessed = (x2.size * x2.dtype.itemsize
                      + wmat.size * wmat.dtype.itemsize
                      + cbias.size * 4 + m2.size * 4 + fcb.size * 4
                      + Bp * Nout * 4)

    # Honest VMEM cap: double-buffered blocks plus headroom for intermediates.
    block_bytes = 2 * (TB * Hp * WpC * 4 + wmat.size * 2 + cbias.size * 4
                       + m2.size * 4 + fcb.size * 4 + TB * Nout * 4)
    vmem_limit = int(max(2 * 1024 * 1024, 4 * block_bytes))

    return pl.pallas_call(
        kernel,
        out_shape=jax.ShapeDtypeStruct((Bp, Nout), jnp.float32),
        grid_spec=pltpu.PrefetchScalarGridSpec(
            num_scalar_prefetch=0,
            grid=(n_tiles,),
            in_specs=[
                pl.BlockSpec((TB, Hp, WpC), lambda t: (t, 0, 0)),     # activation
                pl.BlockSpec((3, WpC, WCout), lambda t: (0, 0, 0)),   # conv mats
                pl.BlockSpec((1, WCout), lambda t: (0, 0)),           # conv bias
                pl.BlockSpec((WCout, Nout), lambda t: (0, 0)),        # GAP @ fc_w
                pl.BlockSpec((1, Nout), lambda t: (0, 0)),            # fc bias
            ],
            out_specs=pl.BlockSpec((TB, Nout), lambda t: (t, 0)),
        ),
        compiler_params=pltpu.CompilerParams(
            dimension_semantics=("parallel",),
            allow_input_fusion=[True, False, False, False, False],
            vmem_limit_bytes=vmem_limit),
        cost_estimate=pl.CostEstimate(
            flops=flops, transcendentals=0, bytes_accessed=bytes_accessed),
    )(x2, wmat, cbias, m2, fcb)


# ------------------------------- JAX glue -----------------------------------

def init_params(key, c_in=4, c_mid=8, n_out=16):
    """Deterministic synthetic parameters (conv weight stored HWIO)."""
    k1, k2, k3, k4 = jax.random.split(key, 4)
    conv_w = 0.1 * jax.random.normal(k1, (3, 3, c_in, c_mid), jnp.float32)
    conv_b = 0.1 * jax.random.normal(k2, (1, c_mid), jnp.float32)
    fc_w = 0.1 * jax.random.normal(k3, (c_mid, n_out), jnp.float32)
    fc_b = 0.1 * jax.random.normal(k4, (1, n_out), jnp.float32)
    return conv_w, conv_b, fc_w, fc_b


def prepare_kernel_params(params, W):
    """ONE-TIME transform of raw params into kernel-ready operands.

    Hoisted out of the per-call forward path (perf review): banded conv-weight
    construction, bias tiling, GAP-into-fc fold and bf16 casts are only redone
    when the parameters change.
    """
    conv_w, conv_b, fc_w, fc_b = params            # conv_w: (3,3,Cin,Cout) HWIO
    Cin, Cout = conv_w.shape[2], conv_w.shape[3]
    Nout = fc_w.shape[-1]
    Wp = W + 2

    # Banded conv weights: wmat[dh, (w+dw)*Cin + c, w*Cout + o] = conv_w[dh,dw,c,o]
    # (zero elsewhere); built once from shifted identities.
    P = jnp.stack(
        [jnp.eye(Wp, W, k=-dw, dtype=jnp.float32) for dw in range(3)])  # (3,Wp,W)
    wmat = jnp.einsum("dpw,hdco->hpcwo", P, conv_w)
    wmat = wmat.reshape(3, Wp * Cin, W * Cout).astype(jnp.bfloat16)

    # Conv bias tiled to the lane-dense (1, W*Cout) layout (folded into the
    # accumulator init in-kernel).
    cbias = jnp.tile(conv_b.reshape(1, Cout), (1, W)).astype(jnp.float32)

    # GAP's sum over w folded into the FC weight: m2[w*Cout + o, n] = fc_w[o, n].
    m2 = jnp.tile(fc_w, (W, 1)).astype(jnp.float32)
    fcb = fc_b.reshape(1, Nout).astype(jnp.float32)

    return {"wmat": wmat, "cbias": cbias, "m2": m2, "fcb": fcb}


@jax.jit
def wrapped_model_forward(x_nchw, prep):
    """== WrappedModel(module)(x): delegates to the inner module's forward."""
    B, Cin, H, W = x_nchw.shape
    wmat, cbias, m2, fcb = prep["wmat"], prep["cbias"], prep["m2"], prep["fcb"]
    Cout = cbias.shape[-1] // W
    Hp, Wp = H + 2, W + 2

    # Activation: NCHW -> NHWC, zero-pad (pad=1), flatten (width, channel) onto
    # the lane axis.  Kept f32 (cast to bf16 inside the kernel at the dot);
    # allow_input_fusion lets XLA fuse this producer into the pallas_call input.
    x_nhwc = jnp.transpose(x_nchw, (0, 2, 3, 1))
    xpad = jnp.pad(x_nhwc, ((0, 0), (1, 1), (1, 1), (0, 0)))
    x2 = xpad.reshape(B, Hp, Wp * Cin)

    # Batch tiling: everything in one grid step when B is small; 128-batch
    # (sublane-aligned) tiles otherwise so "parallel" can spread tiles over
    # both v7x TensorCores.  Each 128-batch f32 block is ~0.7 MiB x 2 buffers,
    # well inside v7x's 64 MiB VMEM.
    TB = B if B <= 128 else 128
    Bp = ((B + TB - 1) // TB) * TB
    if Bp != B:
        x2 = jnp.pad(x2, ((0, Bp - B), (0, 0), (0, 0)))

    out = fused_forward(x2, wmat, cbias, m2, fcb, H=H, W=W, Cout=Cout, TB=TB)
    return out[:B] if Bp != B else out


def reference_forward(x_nchw, params):
    """Pure-JAX f32 reference of the same backbone (for a numeric self-check)."""
    conv_w, conv_b, fc_w, fc_b = params
    x_nhwc = jnp.transpose(x_nchw, (0, 2, 3, 1)).astype(jnp.float32)
    feat = jax.lax.conv_general_dilated(
        x_nhwc, conv_w, window_strides=(1, 1), padding="SAME",
        dimension_numbers=("NHWC", "HWIO", "NHWC"))
    feat = jnp.maximum(feat + conv_b.reshape(1, 1, 1, -1), 0.0)
    pooled = feat.mean(axis=(1, 2))
    return pooled @ fc_w + fc_b


# --------------------------------- main --------------------------------------

if __name__ == "__main__":
    key = jax.random.PRNGKey(0)
    kx, kp = jax.random.split(key)
    x = jax.random.normal(kx, (2, 4, 16, 16), jnp.float32)     # NCHW input
    params = init_params(kp)

    # One-time parameter prep (hoisted out of the per-call path).
    prep = prepare_kernel_params(params, W=16)
    jax.block_until_ready(prep)

    out = wrapped_model_forward(x, prep)
    jax.block_until_ready(out)
    assert out.shape == (2, 16), out.shape
    assert out.dtype == jnp.float32

    ref = reference_forward(x, params)
    err = float(jnp.max(jnp.abs(out - ref)))
    assert err < 2e-2, f"max abs diff vs reference too large: {err}"
    print("KERNEL_OK")
</pallas_src>

<mosaic_0001>
module attributes {stable_mosaic.version = 11 : i64} {
  func.func @kernel(%arg0: i32, %arg1: memref<2x18x72xf32, #tpu.memory_space<vmem>>, %arg2: memref<3x72x128xbf16, #tpu.memory_space<vmem>>, %arg3: memref<1x128xf32, #tpu.memory_space<vmem>>, %arg4: memref<128x16xf32, #tpu.memory_space<vmem>>, %arg5: memref<1x16xf32, #tpu.memory_space<vmem>>, %arg6: memref<2x16xf32, #tpu.memory_space<vmem>>) attributes {dimension_semantics = [#tpu.dimension_semantics<parallel>], iteration_bounds = array<i64: 1>, scalar_prefetch = 0 : i64, scratch_operands = 0 : i64, tpu.core_type = #tpu.core_type<tc>, window_params = [{transform_indices = @transform_0, window_bounds = array<i64: 2, 18, 72>}, {pipeline_mode = #tpu.pipeline_mode<synchronous>, transform_indices = @transform_1, window_bounds = array<i64: 3, 72, 128>}, {pipeline_mode = #tpu.pipeline_mode<synchronous>, transform_indices = @transform_2, window_bounds = array<i64: 1, 128>}, {pipeline_mode = #tpu.pipeline_mode<synchronous>, transform_indices = @transform_3, window_bounds = array<i64: 128, 16>}, {pipeline_mode = #tpu.pipeline_mode<synchronous>, transform_indices = @transform_4, window_bounds = array<i64: 1, 16>}, {transform_indices = @transform_5, window_bounds = array<i64: 2, 16>}]} {
    %c0 = arith.constant 0 : index
    %c0_0 = arith.constant 0 : index
    %0 = vector.load %arg3[%c0, %c0_0] : memref<1x128xf32, #tpu.memory_space<vmem>>, vector<1x128xf32>
    %1 = vector.shape_cast %0 : vector<1x128xf32> to vector<1x128xf32>
    %2 = vector.broadcast %1 : vector<1x128xf32> to vector<32x128xf32>
    %c0_1 = arith.constant 0 : index
    %c0_2 = arith.constant 0 : index
    %c0_3 = arith.constant 0 : index
    %3 = vector.load %arg1[%c0_1, %c0_2, %c0_3] : memref<2x18x72xf32, #tpu.memory_space<vmem>>, vector<2x16x72xf32>
    %4 = vector.shape_cast %3 : vector<2x16x72xf32> to vector<32x72xf32>
    %5 = arith.truncf %4 : vector<32x72xf32> to vector<32x72xbf16>
    %c0_4 = arith.constant 0 : index
    %c0_5 = arith.constant 0 : index
    %c0_6 = arith.constant 0 : index
    %6 = vector.load %arg2[%c0_4, %c0_5, %c0_6] : memref<3x72x128xbf16, #tpu.memory_space<vmem>>, vector<1x72x128xbf16>
    %7 = vector.shape_cast %6 : vector<1x72x128xbf16> to vector<72x128xbf16>
    %cst = arith.constant dense<0.000000e+00> : vector<32x128xf32>
    %8 = tpu.matmul %5, %7, %cst {dimension_numbers = #tpu.dot_dimension_numbers<[1], [0], [0], [1], [0, 0, 1, 1], [], []>} : vector<32x72xbf16>, vector<72x128xbf16>, vector<32x128xf32> -> vector<32x128xf32>
    %9 = arith.addf %2, %8 : vector<32x128xf32>
    %c0_7 = arith.constant 0 : index
    %c1 = arith.constant 1 : index
    %c0_8 = arith.constant 0 : index
    %10 = vector.load %arg1[%c0_7, %c1, %c0_8] : memref<2x18x72xf32, #tpu.memory_space<vmem>>, vector<2x16x72xf32>
    %11 = vector.shape_cast %10 : vector<2x16x72xf32> to vector<32x72xf32>
    %12 = arith.truncf %11 : vector<32x72xf32> to vector<32x72xbf16>
    %c1_9 = arith.constant 1 : index
    %c0_10 = arith.constant 0 : index
    %c0_11 = arith.constant 0 : index
    %13 = vector.load %arg2[%c1_9, %c0_10, %c0_11] : memref<3x72x128xbf16, #tpu.memory_space<vmem>>, vector<1x72x128xbf16>
    %14 = vector.shape_cast %13 : vector<1x72x128xbf16> to vector<72x128xbf16>
    %cst_12 = arith.constant dense<0.000000e+00> : vector<32x128xf32>
    %15 = tpu.matmul %12, %14, %cst_12 {dimension_numbers = #tpu.dot_dimension_numbers<[1], [0], [0], [1], [0, 0, 1, 1], [], []>} : vector<32x72xbf16>, vector<72x128xbf16>, vector<32x128xf32> -> vector<32x128xf32>
    %16 = arith.addf %9, %15 : vector<32x128xf32>
    %c0_13 = arith.constant 0 : index
    %c2 = arith.constant 2 : index
    %c0_14 = arith.constant 0 : index
    %17 = vector.load %arg1[%c0_13, %c2, %c0_14] : memref<2x18x72xf32, #tpu.memory_space<vmem>>, vector<2x16x72xf32>
    %18 = vector.shape_cast %17 : vector<2x16x72xf32> to vector<32x72xf32>
    %19 = arith.truncf %18 : vector<32x72xf32> to vector<32x72xbf16>
    %c2_15 = arith.constant 2 : index
    %c0_16 = arith.constant 0 : index
    %c0_17 = arith.constant 0 : index
    %20 = vector.load %arg2[%c2_15, %c0_16, %c0_17] : memref<3x72x128xbf16, #tpu.memory_space<vmem>>, vector<1x72x128xbf16>
    %21 = vector.shape_cast %20 : vector<1x72x128xbf16> to vector<72x128xbf16>
    %cst_18 = arith.constant dense<0.000000e+00> : vector<32x128xf32>
    %22 = tpu.matmul %19, %21, %cst_18 {dimension_numbers = #tpu.dot_dimension_numbers<[1], [0], [0], [1], [0, 0, 1, 1], [], []>} : vector<32x72xbf16>, vector<72x128xbf16>, vector<32x128xf32> -> vector<32x128xf32>
    %23 = arith.addf %16, %22 : vector<32x128xf32>
    %cst_19 = arith.constant 0.000000e+00 : f32
    %24 = vector.broadcast %cst_19 : f32 to vector<32x128xf32>
    %25 = arith.maximumf %23, %24 : vector<32x128xf32>
    %26 = vector.shape_cast %25 : vector<32x128xf32> to vector<2x16x128xf32>
    %cst_20 = arith.constant dense<0.000000e+00> : vector<2x128xf32>
    %27 = vector.multi_reduction <add>, %26, %cst_20 [1] : vector<2x16x128xf32> to vector<2x128xf32>
    %c0_21 = arith.constant 0 : index
    %c0_22 = arith.constant 0 : index
    %28 = vector.load %arg4[%c0_21, %c0_22] : memref<128x16xf32, #tpu.memory_space<vmem>>, vector<128x16xf32>
    %cst_23 = arith.constant dense<0.000000e+00> : vector<2x16xf32>
    %29 = tpu.matmul %27, %28, %cst_23 {dimension_numbers = #tpu.dot_dimension_numbers<[1], [0], [0], [1], [0, 0, 1, 1], [], []>} : vector<2x128xf32>, vector<128x16xf32>, vector<2x16xf32> -> vector<2x16xf32>
    %cst_24 = arith.constant 3.906250e-03 : f32
    %30 = vector.broadcast %cst_24 : f32 to vector<2x16xf32>
    %31 = arith.mulf %29, %30 : vector<2x16xf32>
    %c0_25 = arith.constant 0 : index
    %c0_26 = arith.constant 0 : index
    %32 = vector.load %arg5[%c0_25, %c0_26] : memref<1x16xf32, #tpu.memory_space<vmem>>, vector<1x16xf32>
    %33 = vector.broadcast %32 : vector<1x16xf32> to vector<2x16xf32>
    %34 = arith.addf %31, %33 : vector<2x16xf32>
    %c0_27 = arith.constant 0 : index
    %c0_28 = arith.constant 0 : index
    %35 = vector.load %arg6[%c0_27, %c0_28] : memref<2x16xf32, #tpu.memory_space<vmem>>, vector<2x16xf32>
    tpu.vector_store %arg6[%c0_27, %c0_28], %34 {strides = array<i32>} : memref<2x16xf32, #tpu.memory_space<vmem>>, vector<2x16xf32>,
    return
  }
  func.func @transform_0(%arg0: i32) -> (i32, i32, i32) {
    %c0_i32 = arith.constant 0 : i32
    %c0_i32_0 = arith.constant 0 : i32
    %c0_i32_1 = arith.constant 0 : i32
    return %arg0, %c0_i32, %c0_i32_0 : i32, i32, i32
  }
  func.func @transform_1(%arg0: i32) -> (i32, i32, i32) {
    %c0_i32 = arith.constant 0 : i32
    %c0_i32_0 = arith.constant 0 : i32
    %c0_i32_1 = arith.constant 0 : i32
    %c0_i32_2 = arith.constant 0 : i32
    return %c0_i32, %c0_i32_0, %c0_i32_1 : i32, i32, i32
  }
  func.func @transform_2(%arg0: i32) -> (i32, i32) {
    %c0_i32 = arith.constant 0 : i32
    %c0_i32_0 = arith.constant 0 : i32
    %c0_i32_1 = arith.constant 0 : i32
    return %c0_i32, %c0_i32_0 : i32, i32
  }
  func.func @transform_3(%arg0: i32) -> (i32, i32) {
    %c0_i32 = arith.constant 0 : i32
    %c0_i32_0 = arith.constant 0 : i32
    %c0_i32_1 = arith.constant 0 : i32
    return %c0_i32, %c0_i32_0 : i32, i32
  }
  func.func @transform_4(%arg0: i32) -> (i32, i32) {
    %c0_i32 = arith.constant 0 : i32
    %c0_i32_0 = arith.constant 0 : i32
    %c0_i32_1 = arith.constant 0 : i32
    return %c0_i32, %c0_i32_0 : i32, i32
  }
  func.func @transform_5(%arg0: i32) -> (i32, i32) {
    %c0_i32 = arith.constant 0 : i32
    %c0_i32_0 = arith.constant 0 : i32
    return %arg0, %c0_i32 : i32, i32
  }
}

</mosaic_0001>

<llo_original>
// kernel: wrapped_model_forward.1
$region0: #{wrapped_model_forward.1}
  #allocation0 [shape = 'u32[]', space=smem, size = 0x4, offset = 0x4, fixed_abs, tag = 'smem constant byte address 0x4 - core index']
  #allocation1 [shape = 'u32[144,128]{1,0:T(1,128)}', space=vmem, size = 0x12000, scoped, tag = 'internal scratch']
  %s0 = inlined_call_operand.vmem [shape: f32[2,18,72], index: 0, kind: input, shape index: {}]
  %s1 = inlined_call_operand.vmem [shape: bf16[3,72,128], index: 1, kind: input, shape index: {}]
  %s2 = inlined_call_operand.vmem [shape: f32[1,128], index: 2, kind: input, shape index: {}]
  %s3 = inlined_call_operand.vmem [shape: f32[128,16], index: 3, kind: input, shape index: {}]
  %s4 = inlined_call_operand.vmem [shape: f32[1,16], index: 4, kind: input, shape index: {}]
  %s5 = inlined_call_operand.hbm [shape: f32[2,16], index: 5, kind: output, shape index: {}]
  %s6 = sld [smem:[#allocation0]]
  $region30: #{wrapped_model_forward.1} parent=0
    _
  %s8 = ssub.s32 1, %s6
  %s9 = scalar_select 0, %s8, %s6
  $region1: #{wrapped_model_forward.1} parent=0
    #allocation2 [shape = 'u8[1024]{0}', space=vmem, size = 0x400, scoped, tag = 'output window, operand 0, single buffered']
    #allocation3 [shape = 's32[1]{0}', space=sflag, size = 0x4, scoped, tag = 'scoped memory for wrapped_model_forward.1']
    %10 = vsyncpa [#allocation3], 0
    // Predicated region
    $region2: #{wrapped_model_forward.1} parent=1 // pred_check
      _
    $region3: #{wrapped_model_forward.1} parent=1 // pred_check_branch
      %12 = sbr.rel (0) target = $region5
    $region4: #{wrapped_model_forward.1} parent=1 // pred_region
      _
    $region5: #{wrapped_model_forward.1} parent=1 // pred_fallthru
      _
    // Predicated region
    $region6: #{wrapped_model_forward.1} parent=1 // pred_check
      _
    $region7: #{wrapped_model_forward.1} parent=1 // pred_check_branch
      %14 = sbr.rel (0) target = $region9
    $region8: #{wrapped_model_forward.1} parent=1 // pred_region
      _
    $region9: #{wrapped_model_forward.1} parent=1 // pred_fallthru
      _
    // Predicated region
    $region10: #{wrapped_model_forward.1} parent=1 // pred_check
      _
    $region11: #{wrapped_model_forward.1} parent=1 // pred_check_branch
      %16 = sbr.rel (0) target = $region13
    $region12: #{wrapped_model_forward.1} parent=1 // pred_region
      _
    $region13: #{wrapped_model_forward.1} parent=1 // pred_fallthru
      _
    // Predicated region
    $region14: #{wrapped_model_forward.1} parent=1 // pred_check
      _
    $region15: #{wrapped_model_forward.1} parent=1 // pred_check_branch
      %18 = sbr.rel (0) target = $region17
    $region16: #{wrapped_model_forward.1} parent=1 // pred_region
      _
    $region17: #{wrapped_model_forward.1} parent=1 // pred_fallthru
      _
    // Predicated region
    $region18: #{wrapped_model_forward.1} parent=1 // pred_check
      _
    $region19: #{wrapped_model_forward.1} parent=1 // pred_check_branch
      %20 = sbr.rel (0) target = $region21
    $region20: #{wrapped_model_forward.1} parent=1 // pred_region
      _
    $region21: #{wrapped_model_forward.1} parent=1 // pred_fallthru
      _
    %v22 = vld [vmem:[%s2] sm:$0x1]
    %v24 = vlaneseq
    %v25 = vshrl.u32 %v24, 7
    %v26 = vsub.s32 0, %v25
    %v27 = vrot.slane %v22, %v26
    %v29 = vld [vmem:[%s0] sm:$0xff]
    %v30 = vld [vmem:[%s0 + $0x8] sm:$0xff]
    %v31 = vld [vmem:[%s0 + $0x18] sm:$0xff]
    %v32 = vld [vmem:[%s0 + $0x20] sm:$0xff]
    %v33 = vpack.c.bf16 %v30, %v29
    %v34 = vpack.c.bf16 %v32, %v31
    %v35 = vld [vmem:[%s1] sm:$0xf]
    %v36 = vld [vmem:[%s1 + $0x4] sm:$0xf]
    %v37 = vld [vmem:[%s1 + $0x8] sm:$0xf]
    %v38 = vld [vmem:[%s1 + $0xc] sm:$0xf]
    %v39 = vld [vmem:[%s1 + $0x10] sm:$0xf]
    %v40 = vld [vmem:[%s1 + $0x14] sm:$0xf]
    %v41 = vld [vmem:[%s1 + $0x18] sm:$0xf]
    %v42 = vld [vmem:[%s1 + $0x1c] sm:$0xf]
    %v43 = vld [vmem:[%s1 + $0x20] sm:$0xf]
    %v53 = vunpack.c.l.b16 %v35
    %v54 = vunpack.c.l.b16 %v36
    %v55 = vunpack.c.l.b16 %v37
    %v56 = vunpack.c.l.b16 %v38
    %v57 = vunpack.c.l.b16 %v39
    %v58 = vunpack.c.l.b16 %v40
    %v59 = vunpack.c.l.b16 %v41
    %v60 = vunpack.c.l.b16 %v42
    %v61 = vunpack.c.l.b16 %v43
    %v62 = vpack.c.b16 %v54, %v53
    %v63 = vpack.c.b16 %v56, %v55
    %v64 = vpack.c.b16 %v58, %v57
    %v65 = vpack.c.b16 %v60, %v59
    %v66 = vpack.c.b16 %v61, %v61
    %vm71 = vcmask 588800
    %v73 = vsel %vm71, %v33, 0
    %v76 = vsel %vm71, %v34, 0
    %vm78 = vcmask 1043456
    %v80 = vsel %vm78, %v66, 0
    %82 = vmatprep.subr.bf16.mxu0 0
    %83 = vmatpush1.bf16.msra.mxu0 %v62
    %84 = vmatprep.subr.bf16.mxu0 0
    %85 = vmatpush1.bf16.msra.mxu0 %v63
    %86 = vmatprep.subr.bf16.mxu0 0
    %87 = vmatpush1.bf16.msra.mxu0 %v64
    %88 = vmatprep.subr.bf16.mxu0 0
    %89 = vmatpush1.bf16.msra.mxu0 %v65
    %90 = vmatprep.subr.bf16.mxu0 0
    %91 = vmatpush1.bf16.msra.mxu0 %v80
    %92 = vmatprep.subr.bf16.mxu0 0
    %93 = vmatpush1.bf16.msra.mxu0 0
    %94 = vmatprep.subr.bf16.mxu0 0
    %95 = vmatpush1.bf16.msra.mxu0 0
    %96 = vmatprep.subr.bf16.mxu0 0
    %97 = vmatpush1.bf16.msra.mxu0 0
    %98 = vmatprep.subr.bf16.mxu0 0
    %99 = vmatpush1.bf16.msra.mxu0 0
    %100 = vmatprep.subr.bf16.mxu0 0
    %101 = vmatpush1.bf16.msra.mxu0 0
    %102 = vmatprep.subr.bf16.mxu0 0
    %103 = vmatpush1.bf16.msra.mxu0 0
    %104 = vmatprep.subr.bf16.mxu0 0
    %105 = vmatpush1.bf16.msra.mxu0 0
    %106 = vmatprep.subr.bf16.mxu0 0
    %107 = vmatpush1.bf16.msra.mxu0 0
    %108 = vmatprep.subr.bf16.mxu0 0
    %109 = vmatpush1.bf16.msra.mxu0 0
    %110 = vmatprep.subr.bf16.mxu0 0
    %111 = vmatpush1.bf16.msra.mxu0 0
    %112 = vmatprep.subr.bf16.mxu0 0
    %113 = vmatpush1.bf16.msra.mxu0 0
    %114 = vmatprep.mubr.bf16.mxu0 0
    %115 = vmatmul.mubr.bf16.gmra.mrb[0].mxu0 %v73
    %v116 = vpop.f32.mrb[0].mxu0
    %v117 = vadd.f32 0.0, %v116
    %v118 = vpop.f32.mrb[0].mxu0
    %v119 = vpop.f32.mrb[0].mxu0
    %v120 = vadd.f32 0.0, %v119
    %v121 = vpop.f32.mrb[0].mxu0
    %122 = vmatprep.mubr.bf16.mxu0 0
    %123 = vmatmul.mubr.bf16.gmra.mrb[0].mxu0 %v76
    %v124 = vpop.f32.mrb[0].mxu0
    %v125 = vadd.f32 0.0, %v124
    %v126 = vpop.f32.mrb[0].mxu0
    %v127 = vpop.f32.mrb[0].mxu0
    %v128 = vadd.f32 0.0, %v127
    %v129 = vpop.f32.mrb[0].mxu0
    %130 = vdwg.mxu0
    %v131 = vadd.f32 %v27, %v117
    %v132 = vadd.f32 %v27, %v120
    %v133 = vadd.f32 %v27, %v125
    %v134 = vadd.f32 %v27, %v128
    %v135 = vld [vmem:[%s0 + $0x1] sm:$0xff]
    %v136 = vld [vmem:[%s0 + $0x9] sm:$0xff]
    %v137 = vld [vmem:[%s0 + $0x19] sm:$0xff]
    %v138 = vld [vmem:[%s0 + $0x21] sm:$0xff]
    %v139 = vpack.c.bf16 %v136, %v135
    %v140 = vpack.c.bf16 %v138, %v137
    %s141 = scalar_lea.vmem %s1, 36
    %v142 = vld [vmem:[%s141] sm:$0xf]
    %v143 = vld [vmem:[%s141 + $0x4] sm:$0xf]
    %v144 = vld [vmem:[%s141 + $0x8] sm:$0xf]
    %v145 = vld [vmem:[%s141 + $0xc] sm:$0xf]
    %v146 = vld [vmem:[%s141 + $0x10] sm:$0xf]
    %v147 = vld [vmem:[%s141 + $0x14] sm:$0xf]
    %v148 = vld [vmem:[%s141 + $0x18] sm:$0xf]
    %v149 = vld [vmem:[%s141 + $0x1c] sm:$0xf]
    %v150 = vld [vmem:[%s141 + $0x20] sm:$0xf]
    %v160 = vunpack.c.l.b16 %v142
    %v161 = vunpack.c.l.b16 %v143
    %v162 = vunpack.c.l.b16 %v144
    %v163 = vunpack.c.l.b16 %v145
    %v164 = vunpack.c.l.b16 %v146
    %v165 = vunpack.c.l.b16 %v147
    %v166 = vunpack.c.l.b16 %v148
    %v167 = vunpack.c.l.b16 %v149
    %v168 = vunpack.c.l.b16 %v150
    %v169 = vpack.c.b16 %v161, %v160
    %v170 = vpack.c.b16 %v163, %v162
    %v171 = vpack.c.b16 %v165, %v164
    %v172 = vpack.c.b16 %v167, %v166
    %v173 = vpack.c.b16 %v168, %v168
    %v179 = vsel %vm71, %v139, 0
    %v182 = vsel %vm71, %v140, 0
    %v185 = vsel %vm78, %v173, 0
    %187 = vmatprep.subr.bf16.mxu0 0
    %188 = vmatpush1.bf16.msra.mxu0 %v169
    %189 = vmatprep.subr.bf16.mxu0 0
    %190 = vmatpush1.bf16.msra.mxu0 %v170
    %191 = vmatprep.subr.bf16.mxu0 0
    %192 = vmatpush1.bf16.msra.mxu0 %v171
    %193 = vmatprep.subr.bf16.mxu0 0
    %194 = vmatpush1.bf16.msra.mxu0 %v172
    %195 = vmatprep.subr.bf16.mxu0 0
    %196 = vmatpush1.bf16.msra.mxu0 %v185
    %197 = vmatprep.subr.bf16.mxu0 0
    %198 = vmatpush1.bf16.msra.mxu0 0
    %199 = vmatprep.subr.bf16.mxu0 0
    %200 = vmatpush1.bf16.msra.mxu0 0
    %201 = vmatprep.subr.bf16.mxu0 0
    %202 = vmatpush1.bf16.msra.mxu0 0
    %203 = vmatprep.subr.bf16.mxu0 0
    %204 = vmatpush1.bf16.msra.mxu0 0
    %205 = vmatprep.subr.bf16.mxu0 0
    %206 = vmatpush1.bf16.msra.mxu0 0
    %207 = vmatprep.subr.bf16.mxu0 0
    %208 = vmatpush1.bf16.msra.mxu0 0
    %209 = vmatprep.subr.bf16.mxu0 0
    %210 = vmatpush1.bf16.msra.mxu0 0
    %211 = vmatprep.subr.bf16.mxu0 0
    %212 = vmatpush1.bf16.msra.mxu0 0
    %213 = vmatprep.subr.bf16.mxu0 0
    %214 = vmatpush1.bf16.msra.mxu0 0
    %215 = vmatprep.subr.bf16.mxu0 0
    %216 = vmatpush1.bf16.msra.mxu0 0
    %217 = vmatprep.subr.bf16.mxu0 0
    %218 = vmatpush1.bf16.msra.mxu0 0
    %219 = vmatprep.mubr.bf16.mxu0 0
    %220 = vmatmul.mubr.bf16.gmra.mrb[0].mxu0 %v179
    %v221 = vpop.f32.mrb[0].mxu0
    %v222 = vadd.f32 0.0, %v221
    %v223 = vpop.f32.mrb[0].mxu0
    %v224 = vpop.f32.mrb[0].mxu0
    %v225 = vadd.f32 0.0, %v224
    %v226 = vpop.f32.mrb[0].mxu0
    %227 = vmatprep.mubr.bf16.mxu0 0
    %228 = vmatmul.mubr.bf16.gmra.mrb[0].mxu0 %v182
    %v229 = vpop.f32.mrb[0].mxu0
    %v230 = vadd.f32 0.0, %v229
    %v231 = vpop.f32.mrb[0].mxu0
    %v232 = vpop.f32.mrb[0].mxu0
    %v233 = vadd.f32 0.0, %v232
    %v234 = vpop.f32.mrb[0].mxu0
    %235 = vdwg.mxu0
    %v236 = vadd.f32 %v131, %v222
    %v237 = vadd.f32 %v132, %v225
    %v238 = vadd.f32 %v133, %v230
    %v239 = vadd.f32 %v134, %v233
    %v240 = vld [vmem:[%s0 + $0x2] sm:$0xff]
    %v241 = vld [vmem:[%s0 + $0xa] sm:$0xff]
    %v242 = vld [vmem:[%s0 + $0x1a] sm:$0xff]
    %v243 = vld [vmem:[%s0 + $0x22] sm:$0xff]
    %v244 = vpack.c.bf16 %v241, %v240
    %v245 = vpack.c.bf16 %v243, %v242
    %s246 = scalar_lea.vmem %s1, 72
    %v247 = vld [vmem:[%s246] sm:$0xf]
    %v248 = vld [vmem:[%s246 + $0x4] sm:$0xf]
    %v249 = vld [vmem:[%s246 + $0x8] sm:$0xf]
    %v250 = vld [vmem:[%s246 + $0xc] sm:$0xf]
    %v251 = vld [vmem:[%s246 + $0x10] sm:$0xf]
    %v252 = vld [vmem:[%s246 + $0x14] sm:$0xf]
    %v253 = vld [vmem:[%s246 + $0x18] sm:$0xf]
    %v254 = vld [vmem:[%s246 + $0x1c] sm:$0xf]
    %v255 = vld [vmem:[%s246 + $0x20] sm:$0xf]
    %v265 = vunpack.c.l.b16 %v247
    %v266 = vunpack.c.l.b16 %v248
    %v267 = vunpack.c.l.b16 %v249
    %v268 = vunpack.c.l.b16 %v250
    %v269 = vunpack.c.l.b16 %v251
    %v270 = vunpack.c.l.b16 %v252
    %v271 = vunpack.c.l.b16 %v253
    %v272 = vunpack.c.l.b16 %v254
    %v273 = vunpack.c.l.b16 %v255
    %v274 = vpack.c.b16 %v266, %v265
    %v275 = vpack.c.b16 %v268, %v267
    %v276 = vpack.c.b16 %v270, %v269
    %v277 = vpack.c.b16 %v272, %v271
    %v278 = vpack.c.b16 %v273, %v273
    %v284 = vsel %vm71, %v244, 0
    %v287 = vsel %vm71, %v245, 0
    %v290 = vsel %vm78, %v278, 0
    %292 = vmatprep.subr.bf16.mxu0 0
    %293 = vmatpush1.bf16.msra.mxu0 %v274
    %294 = vmatprep.subr.bf16.mxu0 0
    %295 = vmatpush1.bf16.msra.mxu0 %v275
    %296 = vmatprep.subr.bf16.mxu0 0
    %297 = vmatpush1.bf16.msra.mxu0 %v276
    %298 = vmatprep.subr.bf16.mxu0 0
    %299 = vmatpush1.bf16.msra.mxu0 %v277
    %300 = vmatprep.subr.bf16.mxu0 0
    %301 = vmatpush1.bf16.msra.mxu0 %v290
    %302 = vmatprep.subr.bf16.mxu0 0
    %303 = vmatpush1.bf16.msra.mxu0 0
    %304 = vmatprep.subr.bf16.mxu0 0
    %305 = vmatpush1.bf16.msra.mxu0 0
    %306 = vmatprep.subr.bf16.mxu0 0
    %307 = vmatpush1.bf16.msra.mxu0 0
    %308 = vmatprep.subr.bf16.mxu0 0
    %309 = vmatpush1.bf16.msra.mxu0 0
    %310 = vmatprep.subr.bf16.mxu0 0
    %311 = vmatpush1.bf16.msra.mxu0 0
    %312 = vmatprep.subr.bf16.mxu0 0
    %313 = vmatpush1.bf16.msra.mxu0 0
    %314 = vmatprep.subr.bf16.mxu0 0
    %315 = vmatpush1.bf16.msra.mxu0 0
    %316 = vmatprep.subr.bf16.mxu0 0
    %317 = vmatpush1.bf16.msra.mxu0 0
    %318 = vmatprep.subr.bf16.mxu0 0
    %319 = vmatpush1.bf16.msra.mxu0 0
    %320 = vmatprep.subr.bf16.mxu0 0
    %321 = vmatpush1.bf16.msra.mxu0 0
    %322 = vmatprep.subr.bf16.mxu0 0
    %323 = vmatpush1.bf16.msra.mxu0 0
    %324 = vmatprep.mubr.bf16.mxu0 0
    %325 = vmatmul.mubr.bf16.gmra.mrb[0].mxu0 %v284
    %v326 = vpop.f32.mrb[0].mxu0
    %v327 = vadd.f32 0.0, %v326
    %v328 = vpop.f32.mrb[0].mxu0
    %v329 = vpop.f32.mrb[0].mxu0
    %v330 = vadd.f32 0.0, %v329
    %v331 = vpop.f32.mrb[0].mxu0
    %332 = vmatprep.mubr.bf16.mxu0 0
    %333 = vmatmul.mubr.bf16.gmra.mrb[0].mxu0 %v287
    %v334 = vpop.f32.mrb[0].mxu0
    %v335 = vadd.f32 0.0, %v334
    %v336 = vpop.f32.mrb[0].mxu0
    %v337 = vpop.f32.mrb[0].mxu0
    %v338 = vadd.f32 0.0, %v337
    %v339 = vpop.f32.mrb[0].mxu0
    %340 = vdwg.mxu0
    %v341 = vadd.f32 %v236, %v327
    %v342 = vadd.f32 %v237, %v330
    %v343 = vadd.f32 %v238, %v335
    %v344 = vadd.f32 %v239, %v338
    %v345 = vmax.f32 %v341, 0.0
    %v346 = vmax.f32 %v342, 0.0
    %v347 = vmax.f32 %v343, 0.0
    %v348 = vmax.f32 %v344, 0.0
    %v349 = vadd.f32 %v345, %v346
    %v350 = vrot.slane %v349, 4
    %v351 = vadd.f32 %v349, %v350
    %v352 = vrot.slane %v351, 2
    %v353 = vadd.f32 %v351, %v352
    %v354 = vrot.slane %v353, 1
    %v355 = vadd.f32 %v353, %v354
    %v356 = vadd.f32 %v347, %v348
    %v357 = vrot.slane %v356, 4
    %v358 = vadd.f32 %v356, %v357
    %v359 = vrot.slane %v358, 2
    %v360 = vadd.f32 %v358, %v359
    %v361 = vrot.slane %v360, 1
    %v362 = vadd.f32 %v360, %v361
    %v363 = vld [vmem:[%s3] sm:$0xff]
    %v364 = vld [vmem:[%s3 + $0x8] sm:$0xff]
    %v365 = vld [vmem:[%s3 + $0x10] sm:$0xff]
    %v366 = vld [vmem:[%s3 + $0x18] sm:$0xff]
    %v367 = vld [vmem:[%s3 + $0x20] sm:$0xff]
    %v368 = vld [vmem:[%s3 + $0x28] sm:$0xff]
    %v369 = vld [vmem:[%s3 + $0x30] sm:$0xff]
    %v370 = vld [vmem:[%s3 + $0x38] sm:$0xff]
    %v371 = vld [vmem:[%s3 + $0x40] sm:$0xff]
    %v372 = vld [vmem:[%s3 + $0x48] sm:$0xff]
    %v373 = vld [vmem:[%s3 + $0x50] sm:$0xff]
    %v374 = vld [vmem:[%s3 + $0x58] sm:$0xff]
    %v375 = vld [vmem:[%s3 + $0x60] sm:$0xff]
    %v376 = vld [vmem:[%s3 + $0x68] sm:$0xff]
    %v377 = vld [vmem:[%s3 + $0x70] sm:$0xff]
    %v378 = vld [vmem:[%s3 + $0x78] sm:$0xff]
    %vm381 = vcmask 1041409
    %v382 = vsel %vm381, %v362, %v355
    %384 = vmatprep.subr.mxu0 0.0
    %385 = vmatpush1.msra.mxu0 %v363
    %386 = vmatprep.subr.mxu0 0.0
    %387 = vmatpush1.msra.mxu0 %v364
    %388 = vmatprep.subr.mxu0 0.0
    %389 = vmatpush1.msra.mxu0 %v365
    %390 = vmatprep.subr.mxu0 0.0
    %391 = vmatpush1.msra.mxu0 %v366
    %392 = vmatprep.subr.mxu0 0.0
    %393 = vmatpush1.msra.mxu0 %v367
    %394 = vmatprep.subr.mxu0 0.0
    %395 = vmatpush1.msra.mxu0 %v368
    %396 = vmatprep.subr.mxu0 0.0
    %397 = vmatpush1.msra.mxu0 %v369
    %398 = vmatprep.subr.mxu0 0.0
    %399 = vmatpush1.msra.mxu0 %v370
    %400 = vmatprep.subr.mxu0 0.0
    %401 = vmatpush1.msra.mxu0 %v371
    %402 = vmatprep.subr.mxu0 0.0
    %403 = vmatpush1.msra.mxu0 %v372
    %404 = vmatprep.subr.mxu0 0.0
    %405 = vmatpush1.msra.mxu0 %v373
    %406 = vmatprep.subr.mxu0 0.0
    %407 = vmatpush1.msra.mxu0 %v374
    %408 = vmatprep.subr.mxu0 0.0
    %409 = vmatpush1.msra.mxu0 %v375
    %410 = vmatprep.subr.mxu0 0.0
    %411 = vmatpush1.msra.mxu0 %v376
    %412 = vmatprep.subr.mxu0 0.0
    %413 = vmatpush1.msra.mxu0 %v377
    %414 = vmatprep.subr.mxu0 0.0
    %415 = vmatpush1.msra.mxu0 %v378
    %416 = vmatprep.subr.mxu0 0.0
    %417 = vmatpush1.msra.mxu0 0.0
    %418 = vmatprep.subr.mxu0 0.0
    %419 = vmatpush1.msra.mxu0 0.0
    %420 = vmatprep.subr.mxu0 0.0
    %421 = vmatpush1.msra.mxu0 0.0
    %422 = vmatprep.subr.mxu0 0.0
    %423 = vmatpush1.msra.mxu0 0.0
    %424 = vmatprep.subr.mxu0 0.0
    %425 = vmatpush1.msra.mxu0 0.0
    %426 = vmatprep.subr.mxu0 0.0
    %427 = vmatpush1.msra.mxu0 0.0
    %428 = vmatprep.subr.mxu0 0.0
    %429 = vmatpush1.msra.mxu0 0.0
    %430 = vmatprep.subr.mxu0 0.0
    %431 = vmatpush1.msra.mxu0 0.0
    %432 = vmatprep.subr.mxu0 0.0
    %433 = vmatpush1.msra.mxu0 0.0
    %434 = vmatprep.subr.mxu0 0.0
    %435 = vmatpush1.msra.mxu0 0.0
    %436 = vmatprep.subr.mxu0 0.0
    %437 = vmatpush1.msra.mxu0 0.0
    %438 = vmatprep.subr.mxu0 0.0
    %439 = vmatpush1.msra.mxu0 0.0
    %440 = vmatprep.subr.mxu0 0.0
    %441 = vmatpush1.msra.mxu0 0.0
    %442 = vmatprep.subr.mxu0 0.0
    %443 = vmatpush1.msra.mxu0 0.0
    %444 = vmatprep.subr.mxu0 0.0
    %445 = vmatpush1.msra.mxu0 0.0
    %446 = vmatprep.subr.mxu0 0.0
    %447 = vmatpush1.msra.mxu0 0.0
    %448 = vmatprep.mubr.f32.mxu0 0.0
    %449 = vmatmul.mubr.f32.gmra.mrb[0].mxu0 %v382
    %v450 = vpop.f32.mrb[0].mxu0
    %v451 = vadd.f32 0.0, %v450
    %v452 = vpop.f32.mrb[0].mxu0
    %453 = vdwg.mxu0
    %v454 = vmul.f32 %v451, 0.00390625
    %v455 = vld [vmem:[%s4] sm:$0x1]
    %v457 = vlaneseq
    %v458 = vshrl.u32 %v457, 7
    %v459 = vsub.s32 0, %v458
    %v460 = vrot.slane %v455, %v459
    %v462 = vadd.f32 %v454, %v460
    %vm463 = vcmask 123904
    %464 = vst.msk [vmem:[#allocation2] sm:$0x3] %vm463, %v462
    // Predicated region
    $region22: #{wrapped_model_forward.1} parent=1 // pred_check
      _
    $region23: #{wrapped_model_forward.1} parent=1 // pred_check_branch
      %466 = sbr.rel (0) target = $region25
    $region24: #{wrapped_model_forward.1} parent=1 // pred_region
      %s468 = ssub.s32 32, 32
      %469 = vsyncadd [#allocation3], %s468
      %s471 = sshll.u32 [#allocation2], 4
      %s472 = int_to_ptr.vmem [resolvable:$true] %s471
      %474 = dma.vmem_to_hbm [thread:$0]  %s472, 32, %s5, [#allocation3]
    $region25: #{wrapped_model_forward.1} parent=1 // pred_fallthru
      _
    // Predicated region
    $region26: #{wrapped_model_forward.1} parent=1 // pred_check
      _
    $region27: #{wrapped_model_forward.1} parent=1 // pred_check_branch
      %476 = sbr.rel (0) target = $region29
    $region28: #{wrapped_model_forward.1} parent=1 // pred_region
      %477 = dma.done [#allocation3], 32
    $region29: #{wrapped_model_forward.1} parent=1 // pred_fallthru
      _
    %478 = vsyncpa [#allocation3], 1

</llo_original>
